<compile_context>
chip_gen: v7x
topology: tpu7x:2x2x1
jax: 0.10.0
libtpu: 0.0.40
codegen_flags: <defaults>
</compile_context>

<pallas_src>
import jax
import jax.numpy as jnp
from jax.experimental import pallas as pl
from jax.experimental.pallas import tpu as pltpu


def _round_up(x, m):
    return ((x + m - 1) // m) * m


def _acvrp_embed_kernel(feat_ref, w_ref, out_ref):
    # feat_ref: (bm, g*16)   g nodes packed per row, 16 masked features each
    # w_ref:    (g*16, g*D)  block-diagonal stack of the fused (16, D) weight
    # out_ref:  (bm, g*D)    g node embeddings packed per row
    out_ref[...] = jnp.dot(
        feat_ref[...], w_ref[...], preferred_element_type=jnp.float32
    ).astype(out_ref.dtype)


def acvrp_init_embedding(locs, weather, demand,
                         w_city, b_city, w_depot, b_depot,
                         *, out_tile_bytes=2 * 1024 * 1024):
    """locs: [B, N+1, 2], weather: [B, 3], demand: [B, N] (customers).

    w_city: [6, D], b_city: [D]   (PyTorch Linear(6, D) weight, transposed)
    w_depot: [5, D], b_depot: [D] (PyTorch Linear(5, D) weight, transposed)
    Returns [B, N+1, D] float32.
    """
    f32 = jnp.float32
    B, n_total, _ = locs.shape
    D = w_city.shape[1]
    total_rows = B * n_total

    locs = locs.astype(f32)
    weather = weather.astype(f32)
    demand = demand.astype(f32)
    w_city = w_city.astype(f32)
    b_city = b_city.astype(f32)
    w_depot = w_depot.astype(f32)
    b_depot = b_depot.astype(f32)

    # Node-packing factor: g nodes per kernel row so the feature block (g*16
    # cols) is exactly lane-dense and the output block (g*D cols) is >= 128.
    g = 8
    while g * D < 128:
        g *= 2

    # ---- per-node masked 16-column features (depot mask folded in; no
    # separate (rows, 1) mask stream, no lane-padded (rows, 6) stream).
    weather_rows = jnp.broadcast_to(weather[:, None, :], (B, n_total, 3))
    demand_full = jnp.concatenate(
        [jnp.zeros((B, 1), f32), demand], axis=1)[..., None]
    base = jnp.concatenate([locs, weather_rows, demand_full], axis=-1)  # (B,n,6)
    m = (jnp.arange(n_total) == 0).astype(f32)[None, :, None]           # (1,n,1)
    feat16 = jnp.concatenate(
        [base * (1.0 - m),                              # 6 city features
         base[..., :5] * m,                             # 5 depot features
         jnp.broadcast_to(m, (B, n_total, 1)),          # depot-bias selector
         jnp.broadcast_to(1.0 - m, (B, n_total, 1)),    # city-bias selector
         jnp.zeros((B, n_total, 3), f32)],              # pad 13 -> 16
        axis=-1).reshape(total_rows, 16)

    rows_pad = _round_up(total_rows, g)
    if rows_pad != total_rows:
        feat16 = jnp.concatenate(
            [feat16, jnp.zeros((rows_pad - total_rows, 16), f32)], axis=0)
    feat_packed = feat16.reshape(rows_pad // g, g * 16)   # width = g*16 (>=128)

    # ---- fused weight: per node  out = feat16 @ W16,
    #      W16 = [Wc(6) ; Wd(5) ; b_depot ; b_city ; 0(3)]  -> block-diag x g.
    w16 = jnp.zeros((16, D), f32)
    w16 = w16.at[0:6, :].set(w_city)
    w16 = w16.at[6:11, :].set(w_depot)
    w16 = w16.at[11, :].set(b_depot)
    w16 = w16.at[12, :].set(b_city)
    w_block = jnp.kron(jnp.eye(g, dtype=f32), w16)         # (g*16, g*D)

    rg = rows_pad // g           # packed rows
    wout = g * D                 # packed output width

    # ---- tile sizing: ~2 MiB output tile (>> 0.35 us step overhead, far
    # under VMEM on every generation).  bm counts packed rows (g nodes each).
    bm = max(8, (out_tile_bytes // (wout * 4)) // 8 * 8)
    if bm >= rg:
        bm = rg
        nblk = 1
    else:
        nblk = pl.cdiv(rg, bm)
        if nblk % 2 == 1:        # keep the parallel grid even for v7x's 2 TCs
            bm_even = max(8, _round_up(pl.cdiv(rg, nblk + 1), 8))
            if bm_even < rg:
                bm = bm_even
                nblk = pl.cdiv(rg, bm)

    out_packed = pl.pallas_call(
        _acvrp_embed_kernel,
        out_shape=jax.ShapeDtypeStruct((rg, wout), f32),
        grid_spec=pltpu.PrefetchScalarGridSpec(
            num_scalar_prefetch=0,
            grid=(nblk,),
            in_specs=[
                pl.BlockSpec((bm, g * 16), lambda i: (i, 0)),    # packed feats
                pl.BlockSpec((g * 16, wout), lambda i: (0, 0)),  # resident W
            ],
            out_specs=pl.BlockSpec((bm, wout), lambda i: (i, 0)),
        ),
        compiler_params=pltpu.CompilerParams(
            dimension_semantics=("parallel",),
            vmem_limit_bytes=32 * 1024 * 1024,
        ),
    )(feat_packed, w_block)

    out = out_packed.reshape(rows_pad, D)                   # free row-major view
    if rows_pad != total_rows:
        out = out[:total_rows]
    return out.reshape(B, n_total, D)


if __name__ == "__main__":
    key = jax.random.PRNGKey(0)
    k_locs, k_w, k_d, k_wc, k_bc, k_wd, k_bd = jax.random.split(key, 7)

    batch = 2
    num_customers = 8            # + 1 depot -> 9 nodes
    embedding_dim = 32

    locs = jax.random.uniform(
        k_locs, (batch, num_customers + 1, 2), jnp.float32)
    weather = jax.random.uniform(k_w, (batch, 3), jnp.float32)
    demand = jax.random.uniform(k_d, (batch, num_customers), jnp.float32)

    # nn.Linear stores weight as [D, in]; we keep the transposed [in, D] layout
    # so the kernel computes x @ W + b (identical math).
    w_city = jax.random.normal(k_wc, (6, embedding_dim), jnp.float32) * 0.5
    b_city = jax.random.normal(k_bc, (embedding_dim,), jnp.float32) * 0.1
    w_depot = jax.random.normal(k_wd, (5, embedding_dim), jnp.float32) * 0.5
    b_depot = jax.random.normal(k_bd, (embedding_dim,), jnp.float32) * 0.1

    out = acvrp_init_embedding(locs, weather, demand,
                               w_city, b_city, w_depot, b_depot)
    out = jax.block_until_ready(out)

    # Plain-JAX reference mirroring the PyTorch forward (full f32 precision).
    hi = jax.lax.Precision.HIGHEST
    depot, cities = locs[:, :1, :], locs[:, 1:, :]
    depot_vec = jnp.concatenate([depot, weather[:, None, :]], -1)
    cities_vec = jnp.concatenate(
        [cities,
         jnp.broadcast_to(weather[:, None, :], (batch, num_customers, 3)),
         demand[..., None]], -1)
    ref = jnp.concatenate(
        [jnp.einsum("bnk,kd->bnd", depot_vec, w_depot, precision=hi) + b_depot,
         jnp.einsum("bnk,kd->bnd", cities_vec, w_city, precision=hi) + b_city],
        axis=1)

    assert out.shape == (batch, num_customers + 1, embedding_dim)
    # Tolerance covers the MXU's multi-pass f32 matmul accuracy while still
    # catching any semantic bug (wrong weight/bias/mask ~ O(0.1) error).
    max_err = float(jnp.max(jnp.abs(out - ref)))
    assert jnp.allclose(out, ref, atol=2e-3, rtol=2e-3), max_err

    print("KERNEL_OK")
</pallas_src>

<mosaic_0001>
module attributes {stable_mosaic.version = 11 : i64} {
  func.func @_acvrp_embed_kernel(%arg0: i32, %arg1: memref<3x128xf32, #tpu.memory_space<vmem>>, %arg2: memref<128x256xf32, #tpu.memory_space<vmem>>, %arg3: memref<3x256xf32, #tpu.memory_space<vmem>>) attributes {dimension_semantics = [#tpu.dimension_semantics<parallel>], iteration_bounds = array<i64: 1>, scalar_prefetch = 0 : i64, scratch_operands = 0 : i64, tpu.core_type = #tpu.core_type<tc>, window_params = [{transform_indices = @transform_0, window_bounds = array<i64: 3, 128>}, {pipeline_mode = #tpu.pipeline_mode<synchronous>, transform_indices = @transform_1, window_bounds = array<i64: 128, 256>}, {transform_indices = @transform_2, window_bounds = array<i64: 3, 256>}]} {
    %c0 = arith.constant 0 : index
    %c0_0 = arith.constant 0 : index
    %0 = vector.load %arg1[%c0, %c0_0] : memref<3x128xf32, #tpu.memory_space<vmem>>, vector<3x128xf32>
    %c0_1 = arith.constant 0 : index
    %c0_2 = arith.constant 0 : index
    %1 = vector.load %arg2[%c0_1, %c0_2] : memref<128x256xf32, #tpu.memory_space<vmem>>, vector<128x256xf32>
    %cst = arith.constant dense<0.000000e+00> : vector<3x256xf32>
    %2 = tpu.matmul %0, %1, %cst {dimension_numbers = #tpu.dot_dimension_numbers<[1], [0], [0], [1], [0, 0, 1, 1], [], []>} : vector<3x128xf32>, vector<128x256xf32>, vector<3x256xf32> -> vector<3x256xf32>
    %c0_3 = arith.constant 0 : index
    %c0_4 = arith.constant 0 : index
    %3 = vector.load %arg3[%c0_3, %c0_4] : memref<3x256xf32, #tpu.memory_space<vmem>>, vector<3x256xf32>
    tpu.vector_store %arg3[%c0_3, %c0_4], %2 {strides = array<i32>} : memref<3x256xf32, #tpu.memory_space<vmem>>, vector<3x256xf32>,
    return
  }
  func.func @transform_0(%arg0: i32) -> (i32, i32) {
    %c0_i32 = arith.constant 0 : i32
    %c0_i32_0 = arith.constant 0 : i32
    return %arg0, %c0_i32 : i32, i32
  }
  func.func @transform_1(%arg0: i32) -> (i32, i32) {
    %c0_i32 = arith.constant 0 : i32
    %c0_i32_0 = arith.constant 0 : i32
    %c0_i32_1 = arith.constant 0 : i32
    return %c0_i32, %c0_i32_0 : i32, i32
  }
  func.func @transform_2(%arg0: i32) -> (i32, i32) {
    %c0_i32 = arith.constant 0 : i32
    %c0_i32_0 = arith.constant 0 : i32
    return %arg0, %c0_i32 : i32, i32
  }
}

</mosaic_0001>

<llo_original>
// kernel: tpu_custom_call.1
$region0: #{tpu_custom_call.1}
  #allocation0 [shape = 'u32[]', space=smem, size = 0x4, offset = 0x4, fixed_abs, tag = 'smem constant byte address 0x4 - core index']
  #allocation1 [shape = 'u32[144,128]{1,0:T(1,128)}', space=vmem, size = 0x12000, scoped, tag = 'internal scratch']
  %s0 = inlined_call_operand.hbm [shape: f32[3,128], index: 0, kind: input, shape index: {}]
  %s1 = inlined_call_operand.hbm [shape: f32[128,256], index: 1, kind: input, shape index: {}]
  %s2 = inlined_call_operand.hbm [shape: f32[3,256], index: 2, kind: output, shape index: {}]
  %s3 = sld [smem:[#allocation0]]
  $region26: #{tpu_custom_call.1} parent=0
    _
  %s5 = ssub.s32 1, %s3
  %s6 = scalar_select 0, %s5, %s3
  $region1: #{tpu_custom_call.1} parent=0
    #allocation2 [shape = 'u8[2048]{0}', space=vmem, size = 0x800, scoped, tag = 'input window, operand 0, single buffered']
    #allocation3 [shape = 's32[1]{0}', space=sflag, size = 0x4, scoped, tag = 'scoped memory for tpu_custom_call.1']
    #allocation4 [shape = 's32[1]{0}', space=sflag, size = 0x4, scoped, tag = 'scoped memory for tpu_custom_call.1']
    #allocation5 [shape = 'u8[131072]{0}', space=vmem, size = 0x20000, scoped, tag = 'input window, operand 1, single buffered']
    #allocation6 [shape = 's32[1]{0}', space=sflag, size = 0x4, scoped, tag = 'scoped memory for tpu_custom_call.1']
    #allocation7 [shape = 'u8[4096]{0}', space=vmem, size = 0x1000, scoped, tag = 'output window, operand 0, single buffered']
    %7 = vsyncpa [#allocation3], 0
    %8 = vsyncpa [#allocation6], 0
    %9 = vsyncpa [#allocation4], 0
    // Predicated region
    $region2: #{tpu_custom_call.1} parent=1 // pred_check
      _
    $region3: #{tpu_custom_call.1} parent=1 // pred_check_branch
      %11 = sbr.rel (0) target = $region5
    $region4: #{tpu_custom_call.1} parent=1 // pred_region
      %s13 = ssub.s32 64, 64
      %14 = vsyncadd [#allocation3], %s13
      %s16 = sshll.u32 [#allocation2], 4
      %s17 = int_to_ptr.vmem [resolvable:$true] %s16
      %19 = dma.hbm_to_vmem [thread:$0]  %s0, 64, %s17, [#allocation3]
    $region5: #{tpu_custom_call.1} parent=1 // pred_fallthru
      _
    // Predicated region
    $region6: #{tpu_custom_call.1} parent=1 // pred_check
      _
    $region7: #{tpu_custom_call.1} parent=1 // pred_check_branch
      %21 = sbr.rel (0) target = $region9
    $region8: #{tpu_custom_call.1} parent=1 // pred_region
      %s23 = ssub.s32 4096, 4096
      %24 = vsyncadd [#allocation6], %s23
      %s25 = sshll.u32 [#allocation5], 4
      %s26 = int_to_ptr.vmem [resolvable:$true] %s25
      %31 = dma.hbm_to_vmem [thread:$0]  %s1, 4096, %s26, [#allocation6], 256, 256, 16
    $region9: #{tpu_custom_call.1} parent=1 // pred_fallthru
      _
    // Predicated region
    $region10: #{tpu_custom_call.1} parent=1 // pred_check
      _
    $region11: #{tpu_custom_call.1} parent=1 // pred_check_branch
      %33 = sbr.rel (0) target = $region13
    $region12: #{tpu_custom_call.1} parent=1 // pred_region
      %34 = dma.done [#allocation3], 64
    $region13: #{tpu_custom_call.1} parent=1 // pred_fallthru
      _
    // Predicated region
    $region14: #{tpu_custom_call.1} parent=1 // pred_check
      _
    $region15: #{tpu_custom_call.1} parent=1 // pred_check_branch
      %36 = sbr.rel (0) target = $region17
    $region16: #{tpu_custom_call.1} parent=1 // pred_region
      %37 = dma.done [#allocation6], 4096
    $region17: #{tpu_custom_call.1} parent=1 // pred_fallthru
      _
    %v38 = vld [vmem:[#allocation2] sm:$0x7]
    %v39 = vld [vmem:[#allocation5] sm:$0xff]
    %v40 = vld [vmem:[#allocation5 + $0x8] sm:$0xff]
    %v41 = vld [vmem:[#allocation5 + $0x10] sm:$0xff]
    %v42 = vld [vmem:[#allocation5 + $0x18] sm:$0xff]
    %v43 = vld [vmem:[#allocation5 + $0x20] sm:$0xff]
    %v44 = vld [vmem:[#allocation5 + $0x28] sm:$0xff]
    %v45 = vld [vmem:[#allocation5 + $0x30] sm:$0xff]
    %v46 = vld [vmem:[#allocation5 + $0x38] sm:$0xff]
    %v47 = vld [vmem:[#allocation5 + $0x40] sm:$0xff]
    %v48 = vld [vmem:[#allocation5 + $0x48] sm:$0xff]
    %v49 = vld [vmem:[#allocation5 + $0x50] sm:$0xff]
    %v50 = vld [vmem:[#allocation5 + $0x58] sm:$0xff]
    %v51 = vld [vmem:[#allocation5 + $0x60] sm:$0xff]
    %v52 = vld [vmem:[#allocation5 + $0x68] sm:$0xff]
    %v53 = vld [vmem:[#allocation5 + $0x70] sm:$0xff]
    %v54 = vld [vmem:[#allocation5 + $0x78] sm:$0xff]
    %v55 = vld [vmem:[#allocation5 + $0x80] sm:$0xff]
    %v56 = vld [vmem:[#allocation5 + $0x88] sm:$0xff]
    %v57 = vld [vmem:[#allocation5 + $0x90] sm:$0xff]
    %v58 = vld [vmem:[#allocation5 + $0x98] sm:$0xff]
    %v59 = vld [vmem:[#allocation5 + $0xa0] sm:$0xff]
    %v60 = vld [vmem:[#allocation5 + $0xa8] sm:$0xff]
    %v61 = vld [vmem:[#allocation5 + $0xb0] sm:$0xff]
    %v62 = vld [vmem:[#allocation5 + $0xb8] sm:$0xff]
    %v63 = vld [vmem:[#allocation5 + $0xc0] sm:$0xff]
    %v64 = vld [vmem:[#allocation5 + $0xc8] sm:$0xff]
    %v65 = vld [vmem:[#allocation5 + $0xd0] sm:$0xff]
    %v66 = vld [vmem:[#allocation5 + $0xd8] sm:$0xff]
    %v67 = vld [vmem:[#allocation5 + $0xe0] sm:$0xff]
    %v68 = vld [vmem:[#allocation5 + $0xe8] sm:$0xff]
    %v69 = vld [vmem:[#allocation5 + $0xf0] sm:$0xff]
    %v70 = vld [vmem:[#allocation5 + $0xf8] sm:$0xff]
    %71 = vmatprep.subr.mxu0 %v40
    %72 = vmatpush1.msra.mxu0 %v39
    %73 = vmatprep.subr.mxu0 %v42
    %74 = vmatpush1.msra.mxu0 %v41
    %75 = vmatprep.subr.mxu0 %v44
    %76 = vmatpush1.msra.mxu0 %v43
    %77 = vmatprep.subr.mxu0 %v46
    %78 = vmatpush1.msra.mxu0 %v45
    %79 = vmatprep.subr.mxu0 %v48
    %80 = vmatpush1.msra.mxu0 %v47
    %81 = vmatprep.subr.mxu0 %v50
    %82 = vmatpush1.msra.mxu0 %v49
    %83 = vmatprep.subr.mxu0 %v52
    %84 = vmatpush1.msra.mxu0 %v51
    %85 = vmatprep.subr.mxu0 %v54
    %86 = vmatpush1.msra.mxu0 %v53
    %87 = vmatprep.subr.mxu0 %v56
    %88 = vmatpush1.msra.mxu0 %v55
    %89 = vmatprep.subr.mxu0 %v58
    %90 = vmatpush1.msra.mxu0 %v57
    %91 = vmatprep.subr.mxu0 %v60
    %92 = vmatpush1.msra.mxu0 %v59
    %93 = vmatprep.subr.mxu0 %v62
    %94 = vmatpush1.msra.mxu0 %v61
    %95 = vmatprep.subr.mxu0 %v64
    %96 = vmatpush1.msra.mxu0 %v63
    %97 = vmatprep.subr.mxu0 %v66
    %98 = vmatpush1.msra.mxu0 %v65
    %99 = vmatprep.subr.mxu0 %v68
    %100 = vmatpush1.msra.mxu0 %v67
    %101 = vmatprep.subr.mxu0 %v70
    %102 = vmatpush1.msra.mxu0 %v69
    %103 = vmatprep.subr.mxu0 0.0
    %104 = vmatpush1.msra.mxu0 0.0
    %105 = vmatprep.subr.mxu0 0.0
    %106 = vmatpush1.msra.mxu0 0.0
    %107 = vmatprep.subr.mxu0 0.0
    %108 = vmatpush1.msra.mxu0 0.0
    %109 = vmatprep.subr.mxu0 0.0
    %110 = vmatpush1.msra.mxu0 0.0
    %111 = vmatprep.subr.mxu0 0.0
    %112 = vmatpush1.msra.mxu0 0.0
    %113 = vmatprep.subr.mxu0 0.0
    %114 = vmatpush1.msra.mxu0 0.0
    %115 = vmatprep.subr.mxu0 0.0
    %116 = vmatpush1.msra.mxu0 0.0
    %117 = vmatprep.subr.mxu0 0.0
    %118 = vmatpush1.msra.mxu0 0.0
    %119 = vmatprep.subr.mxu0 0.0
    %120 = vmatpush1.msra.mxu0 0.0
    %121 = vmatprep.subr.mxu0 0.0
    %122 = vmatpush1.msra.mxu0 0.0
    %123 = vmatprep.subr.mxu0 0.0
    %124 = vmatpush1.msra.mxu0 0.0
    %125 = vmatprep.subr.mxu0 0.0
    %126 = vmatpush1.msra.mxu0 0.0
    %127 = vmatprep.subr.mxu0 0.0
    %128 = vmatpush1.msra.mxu0 0.0
    %129 = vmatprep.subr.mxu0 0.0
    %130 = vmatpush1.msra.mxu0 0.0
    %131 = vmatprep.subr.mxu0 0.0
    %132 = vmatpush1.msra.mxu0 0.0
    %133 = vmatprep.subr.mxu0 0.0
    %134 = vmatpush1.msra.mxu0 0.0
    %135 = vmatprep.mubr.f32.mxu0 0.0
    %136 = vmatmul.mubr.f32.gmra.mrb[0].mxu0 %v38
    %v137 = vpop.f32.mrb[0].mxu0
    %v138 = vadd.f32 0.0, %v137
    %v139 = vpop.f32.mrb[0].mxu0
    %v140 = vadd.f32 0.0, %v139
    %141 = vdwg.mxu0
    %v144 = vcombine.low %v138, %v140
    %146 = vst [vmem:[#allocation7] sm:$0x77] %v144
    // Predicated region
    $region18: #{tpu_custom_call.1} parent=1 // pred_check
      _
    $region19: #{tpu_custom_call.1} parent=1 // pred_check_branch
      %148 = sbr.rel (0) target = $region21
    $region20: #{tpu_custom_call.1} parent=1 // pred_region
      %s150 = ssub.s32 128, 128
      %151 = vsyncadd [#allocation4], %s150
      %s153 = sshll.u32 [#allocation7], 4
      %s154 = int_to_ptr.vmem [resolvable:$true] %s153
      %156 = dma.vmem_to_hbm [thread:$0]  %s154, 128, %s2, [#allocation4]
    $region21: #{tpu_custom_call.1} parent=1 // pred_fallthru
      _
    // Predicated region
    $region22: #{tpu_custom_call.1} parent=1 // pred_check
      _
    $region23: #{tpu_custom_call.1} parent=1 // pred_check_branch
      %158 = sbr.rel (0) target = $region25
    $region24: #{tpu_custom_call.1} parent=1 // pred_region
      %159 = dma.done [#allocation4], 128
    $region25: #{tpu_custom_call.1} parent=1 // pred_fallthru
      _
    %160 = vsyncpa [#allocation3], 1
    %161 = vsyncpa [#allocation6], 1
    %162 = vsyncpa [#allocation4], 1

</llo_original>
